<compile_context>
chip_gen: v6e
topology: v6e:2x2x1
jax: 0.10.0
libtpu: 0.0.40
codegen_flags: <defaults>
</compile_context>

<pallas_src>
import functools

import jax
import jax.numpy as jnp
from jax.experimental import pallas as pl
from jax.experimental.pallas import tpu as pltpu


def _round_up(a: int, b: int) -> int:
    return ((a + b - 1) // b) * b


def _cdiv(a: int, b: int) -> int:
    return (a + b - 1) // b


def _tpu_kind():
    """Best-effort TPU generation string (lowercased), or None."""
    try:
        d = jax.devices()[0]
        if d.platform != "tpu":
            return None
        return d.device_kind.lower()
    except Exception:
        return None


def _hypercube_kernel(x_ref, w_ref, b_ref, o_ref, *, split_matmul: bool):
    # x_ref: (TN, S*S)   flattened hypercube rows (lane-dense)
    # w_ref: (S*S, S*S)  block-diagonal weight, fully resident in VMEM
    # b_ref: (1,  S*S)   bias tiled S times
    # o_ref: (TN, S*S)
    x = x_ref[...]
    if split_matmul:
        # v5e path: the 128x128 MXU would decompose the 256-wide matmul into
        # 4 tile passes, 2 of which are all-zero off-diagonal blocks. Two
        # independent 128-wide matmuls do the same work in 2 passes.
        h = w_ref.shape[0] // 2
        y = jnp.concatenate(
            [jnp.dot(x[:, :h], w_ref[:h, :h], preferred_element_type=jnp.float32),
             jnp.dot(x[:, h:], w_ref[h:, h:], preferred_element_type=jnp.float32)],
            axis=-1)
    else:
        y = jnp.dot(x, w_ref[...], preferred_element_type=jnp.float32)
    o_ref[...] = (y + b_ref[...].astype(jnp.float32)).astype(o_ref.dtype)


def prepare_hypercube_params(weight, bias, dtype=None):
    """Build (once, when weights are loaded/updated) the block-diagonal weight
    and tiled bias consumed by hypercube_forward. Hoisted out of the per-call
    forward so its HBM write+read is not paid on every step.

    weight: (O, S, S); bias: (O,). Requires O == S (same as the PyTorch forward).
    Returns w_bd: (S*S, S*S), bias_flat: (1, S*S), both in `dtype`
    (default: weight.dtype; pass jnp.bfloat16 for bf16 HBM I/O).
    """
    O, S, S2 = weight.shape
    assert S == S2, "weight must be (O, S, S)"
    assert O == S, ("HyperCubeLayer forward only broadcasts when "
                    "out_sqrt_features == sqrt(in_features)")
    dtype = weight.dtype if dtype is None else jnp.dtype(dtype)
    F = S * S
    # Exact (no-matmul) block-diagonal placement: W_bd[i*S+j, l*S+k] =
    # weight[i, j, k] if i == l else 0.
    i_idx = jnp.arange(S)[:, None, None, None]
    l_idx = jnp.arange(S)[None, None, :, None]
    w_bd = jnp.where(i_idx == l_idx, weight[:, :, None, :], 0).reshape(F, F).astype(dtype)
    # bias_flat[0, i*S + k] = bias[k]
    bias_flat = jnp.tile(bias, S).reshape(1, F).astype(dtype)
    return w_bd, bias_flat


@functools.partial(
    jax.jit,
    static_argnames=("block_n", "vmem_limit_bytes", "out_dtype", "split_matmul"))
def hypercube_forward(x, w_bd, bias_flat, *, block_n=None, vmem_limit_bytes=None,
                      out_dtype=None, split_matmul=None):
    """x: (..., S*S); w_bd: (S*S, S*S); bias_flat: (1, S*S) -> (..., S*S).

    HBM I/O dtype follows the dtypes of x / w_bd / bias_flat (pass bf16 tensors
    for bf16 I/O); MXU accumulation is always f32. Output dtype defaults to
    x.dtype.
    """
    *lead, F = x.shape
    Fw, F2 = w_bd.shape
    assert Fw == F and F2 == F, "w_bd must be (S*S, S*S) matching x's last dim"
    S = int(round(F ** 0.5))

    N = 1
    for d in lead:
        N *= d
    out_dtype = x.dtype if out_dtype is None else jnp.dtype(out_dtype)

    kind = _tpu_kind()
    is_v7 = kind is not None and ("v7" in kind or "7x" in kind)
    is_v5 = kind is not None and "v5" in kind
    elem_bytes = max(jnp.dtype(x.dtype).itemsize, jnp.dtype(out_dtype).itemsize)

    # VMEM budget: v5e/v6e have 128 MiB physical (raise scoped limit to 64 MiB);
    # v7x has 64 MiB physical (stay at 40 MiB). Unknown -> conservative 40 MiB.
    if vmem_limit_bytes is None:
        vmem_limit_bytes = (64 if (kind is not None and not is_v7) else 40) * 1024 * 1024

    # Tile size on the N axis: 8192 rows on v5e/v6e; on v7x 4096 for 4-byte I/O
    # and 8192 for <=2-byte I/O (bf16). Double-buffered x+out tiles stay well
    # inside the per-generation VMEM budget for S=16 (F=256).
    auto_block = block_n is None
    if auto_block:
        block_n = 8192 if ((kind is not None and not is_v7) or elem_bytes <= 2) else 4096
    block_n = max(8, _round_up(min(block_n, _round_up(N, 8)), 8))
    # v7x has 2 TensorCores: keep >= 2 grid blocks so the "parallel" axis can
    # shard across both cores instead of idling half the chip.
    if auto_block and is_v7 and N > 8 and _cdiv(N, block_n) < 2:
        block_n = max(8, _round_up(_cdiv(N, 2), 8))

    if split_matmul is None:
        # Only worth it on the 128x128-MXU generations, and only when the
        # 128-lane boundary lands on a block-diagonal boundary.
        split_matmul = bool(is_v5 and F % 256 == 0 and (F // 2) % S == 0)

    x_flat = x.reshape(N, F)              # layout no-op (last dim contiguous)
    num_blocks = _cdiv(N, block_n)        # ragged tail handled by masked stores

    kernel = functools.partial(_hypercube_kernel, split_matmul=bool(split_matmul))

    out = pl.pallas_call(
        kernel,
        out_shape=jax.ShapeDtypeStruct((N, F2), out_dtype),
        grid_spec=pltpu.PrefetchScalarGridSpec(
            num_scalar_prefetch=0,
            grid=(num_blocks,),
            in_specs=[
                pl.BlockSpec((block_n, F), lambda n: (n, 0)),
                pl.BlockSpec((F, F2), lambda n: (0, 0)),   # grid-invariant weight
                pl.BlockSpec((1, F2), lambda n: (0, 0)),   # grid-invariant bias
            ],
            out_specs=pl.BlockSpec((block_n, F2), lambda n: (n, 0)),
        ),
        compiler_params=pltpu.CompilerParams(
            dimension_semantics=("parallel",),
            vmem_limit_bytes=vmem_limit_bytes,
        ),
    )(x_flat, w_bd, bias_flat)

    return out.reshape(*lead, F2)          # layout no-op


def _reference(x, weight, bias):
    B, M, F = x.shape
    O, S, _ = weight.shape
    xr = x.reshape(B, M, S, S)
    out = jnp.einsum("bmij,ijk->bmik", xr, weight) + bias[None, None, None, :]
    return out.reshape(B, M, O * S)


if __name__ == "__main__":
    # Module config: in_features = 256 -> hc_input_size S = 16,
    # out_sqrt_features O = 16 (== S, required by the forward's broadcasting).
    S = 16
    in_features = S * S
    out_sqrt_features = S

    key = jax.random.PRNGKey(0)
    kx, kw, kb, kx2, kx3 = jax.random.split(key, 5)

    # Deterministic init mimicking kaiming_uniform / uniform bias bounds.
    fan_in = S  # fan_in of an (O, S, S) weight = S
    w_bound = (6.0 / ((1.0 + 5.0) * fan_in)) ** 0.5   # kaiming_uniform, a=sqrt(5)
    b_bound = 1.0 / (fan_in ** 0.5)
    weight = jax.random.uniform(kw, (out_sqrt_features, S, S),
                                jnp.float32, -w_bound, w_bound)
    bias = jax.random.uniform(kb, (out_sqrt_features,),
                              jnp.float32, -b_bound, b_bound)

    # Block-diagonal params built ONCE (hoisted out of the forward).
    w_bd_f32, bias_f32 = prepare_hypercube_params(weight, bias)
    w_bd_bf16, bias_bf16 = prepare_hypercube_params(weight, bias, dtype=jnp.bfloat16)

    # Case 1: f32 I/O, small shape, auto tiling.
    B, M = 2, 8
    x = jax.random.normal(kx, (B, M, in_features), jnp.float32)
    out = jax.block_until_ready(hypercube_forward(x, w_bd_f32, bias_f32))
    ref = _reference(x, weight, bias)
    assert out.shape == (B, M, out_sqrt_features * S)
    assert jnp.allclose(out, ref, atol=1e-5, rtol=1e-5), "mismatch vs reference (case 1)"

    # Case 2: ragged N (N % block_n != 0) -> multi-step grid with masked tail
    # stores, no wrapper-side pad/slice. Also exercises the 128-wide split
    # (v5e) kernel variant explicitly.
    B2, M2 = 3, 5
    x2 = jax.random.normal(kx2, (B2, M2, in_features), jnp.float32)
    out2 = jax.block_until_ready(
        hypercube_forward(x2, w_bd_f32, bias_f32, block_n=8, split_matmul=True))
    ref2 = _reference(x2, weight, bias)
    assert out2.shape == (B2, M2, out_sqrt_features * S)
    assert jnp.allclose(out2, ref2, atol=1e-5, rtol=1e-5), "mismatch vs reference (case 2)"

    # Case 3: bf16 HBM I/O (the biggest bandwidth lever) — bf16 x / weight /
    # output, f32 MXU accumulation inside the kernel.
    B3, M3 = 4, 64
    x3 = jax.random.normal(kx3, (B3, M3, in_features), jnp.float32)
    x3_bf16 = x3.astype(jnp.bfloat16)
    out3 = jax.block_until_ready(hypercube_forward(x3_bf16, w_bd_bf16, bias_bf16))
    assert out3.dtype == jnp.bfloat16
    ref3 = _reference(x3_bf16.astype(jnp.float32),
                      weight.astype(jnp.bfloat16).astype(jnp.float32),
                      bias.astype(jnp.bfloat16).astype(jnp.float32))
    assert out3.shape == (B3, M3, out_sqrt_features * S)
    assert jnp.allclose(out3.astype(jnp.float32), ref3, atol=5e-2, rtol=5e-2), \
        "mismatch vs reference (case 3, bf16)"

    print("KERNEL_OK")
</pallas_src>

<mosaic_0001>
module attributes {stable_mosaic.version = 11 : i64} {
  func.func @_hypercube_kernel(%arg0: i32, %arg1: memref<16x256xf32, #tpu.memory_space<vmem>>, %arg2: memref<256x256xf32, #tpu.memory_space<vmem>>, %arg3: memref<1x256xf32, #tpu.memory_space<vmem>>, %arg4: memref<16x256xf32, #tpu.memory_space<vmem>>) attributes {dimension_semantics = [#tpu.dimension_semantics<parallel>], iteration_bounds = array<i64: 1>, scalar_prefetch = 0 : i64, scratch_operands = 0 : i64, tpu.core_type = #tpu.core_type<tc>, window_params = [{transform_indices = @transform_0, window_bounds = array<i64: 16, 256>}, {pipeline_mode = #tpu.pipeline_mode<synchronous>, transform_indices = @transform_1, window_bounds = array<i64: 256, 256>}, {pipeline_mode = #tpu.pipeline_mode<synchronous>, transform_indices = @transform_2, window_bounds = array<i64: 1, 256>}, {transform_indices = @transform_3, window_bounds = array<i64: 16, 256>}]} {
    %c0 = arith.constant 0 : index
    %c0_0 = arith.constant 0 : index
    %0 = vector.load %arg1[%c0, %c0_0] : memref<16x256xf32, #tpu.memory_space<vmem>>, vector<16x256xf32>
    %c0_1 = arith.constant 0 : index
    %c0_2 = arith.constant 0 : index
    %1 = vector.load %arg2[%c0_1, %c0_2] : memref<256x256xf32, #tpu.memory_space<vmem>>, vector<256x256xf32>
    %cst = arith.constant dense<0.000000e+00> : vector<16x256xf32>
    %2 = tpu.matmul %0, %1, %cst {dimension_numbers = #tpu.dot_dimension_numbers<[1], [0], [0], [1], [0, 0, 1, 1], [], []>} : vector<16x256xf32>, vector<256x256xf32>, vector<16x256xf32> -> vector<16x256xf32>
    %c0_3 = arith.constant 0 : index
    %c0_4 = arith.constant 0 : index
    %3 = vector.load %arg3[%c0_3, %c0_4] : memref<1x256xf32, #tpu.memory_space<vmem>>, vector<1x256xf32>
    %4 = vector.broadcast %3 : vector<1x256xf32> to vector<16x256xf32>
    %5 = arith.addf %2, %4 : vector<16x256xf32>
    %c0_5 = arith.constant 0 : index
    %c0_6 = arith.constant 0 : index
    %6 = vector.load %arg4[%c0_5, %c0_6] : memref<16x256xf32, #tpu.memory_space<vmem>>, vector<16x256xf32>
    tpu.vector_store %arg4[%c0_5, %c0_6], %5 {strides = array<i32>} : memref<16x256xf32, #tpu.memory_space<vmem>>, vector<16x256xf32>,
    return
  }
  func.func @transform_0(%arg0: i32) -> (i32, i32) {
    %c0_i32 = arith.constant 0 : i32
    %c0_i32_0 = arith.constant 0 : i32
    return %arg0, %c0_i32 : i32, i32
  }
  func.func @transform_1(%arg0: i32) -> (i32, i32) {
    %c0_i32 = arith.constant 0 : i32
    %c0_i32_0 = arith.constant 0 : i32
    %c0_i32_1 = arith.constant 0 : i32
    return %c0_i32, %c0_i32_0 : i32, i32
  }
  func.func @transform_2(%arg0: i32) -> (i32, i32) {
    %c0_i32 = arith.constant 0 : i32
    %c0_i32_0 = arith.constant 0 : i32
    %c0_i32_1 = arith.constant 0 : i32
    return %c0_i32, %c0_i32_0 : i32, i32
  }
  func.func @transform_3(%arg0: i32) -> (i32, i32) {
    %c0_i32 = arith.constant 0 : i32
    %c0_i32_0 = arith.constant 0 : i32
    return %arg0, %c0_i32 : i32, i32
  }
}

</mosaic_0001>

<llo_original>
// kernel: hypercube_forward.1
$region0: #{hypercube_forward.1}
  #allocation0 [shape = 'u32[]', space=smem, size = 0x4, offset = 0x4, fixed_abs, tag = 'smem constant byte address 0x4 - core index']
  #allocation1 [shape = 'u32[144,128]{1,0:T(1,128)}', space=vmem, size = 0x12000, scoped, tag = 'internal scratch']
  %s0 = inlined_call_operand.hbm [shape: f32[16,256], index: 0, kind: input, shape index: {}]
  %s1 = inlined_call_operand.hbm [shape: f32[256,256], index: 1, kind: input, shape index: {}]
  %s2 = inlined_call_operand.vmem [shape: f32[1,256], index: 2, kind: input, shape index: {}]
  %s3 = inlined_call_operand.hbm [shape: f32[16,256], index: 3, kind: output, shape index: {}]
  %s4 = sld [smem:[#allocation0]]
  $region30: #{hypercube_forward.1} parent=0
    _
  %s6 = ssub.s32 1, %s4
  %s7 = scalar_select 0, %s6, %s4
  $region1: #{hypercube_forward.1} parent=0
    #allocation2 [shape = 'u8[16384]{0}', space=vmem, size = 0x4000, scoped, tag = 'input window, operand 0, single buffered']
    #allocation3 [shape = 's32[1]{0}', space=sflag, size = 0x4, scoped, tag = 'scoped memory for hypercube_forward.1']
    #allocation4 [shape = 's32[1]{0}', space=sflag, size = 0x4, scoped, tag = 'scoped memory for hypercube_forward.1']
    #allocation5 [shape = 'u8[262144]{0}', space=vmem, size = 0x40000, scoped, tag = 'input window, operand 1, single buffered']
    #allocation6 [shape = 's32[1]{0}', space=sflag, size = 0x4, scoped, tag = 'scoped memory for hypercube_forward.1']
    #allocation7 [shape = 'u8[16384]{0}', space=vmem, size = 0x4000, scoped, tag = 'output window, operand 0, single buffered']
    %8 = vsyncpa [#allocation3], 0
    %9 = vsyncpa [#allocation6], 0
    %10 = vsyncpa [#allocation4], 0
    // Predicated region
    $region2: #{hypercube_forward.1} parent=1 // pred_check
      _
    $region3: #{hypercube_forward.1} parent=1 // pred_check_branch
      %12 = sbr.rel (0) target = $region5
    $region4: #{hypercube_forward.1} parent=1 // pred_region
      %s14 = ssub.s32 512, 512
      %15 = vsyncadd [#allocation3], %s14
      %s16 = sshll.u32 [#allocation2], 4
      %s17 = int_to_ptr.vmem [resolvable:$true] %s16
      %22 = dma.hbm_to_vmem [thread:$0]  %s0, 512, %s17, [#allocation3], 256, 256, 16
    $region5: #{hypercube_forward.1} parent=1 // pred_fallthru
      _
    // Predicated region
    $region6: #{hypercube_forward.1} parent=1 // pred_check
      _
    $region7: #{hypercube_forward.1} parent=1 // pred_check_branch
      %24 = sbr.rel (0) target = $region9
    $region8: #{hypercube_forward.1} parent=1 // pred_region
      %s26 = ssub.s32 8192, 8192
      %27 = vsyncadd [#allocation6], %s26
      %s28 = sshll.u32 [#allocation5], 4
      %s29 = int_to_ptr.vmem [resolvable:$true] %s28
      %34 = dma.hbm_to_vmem [thread:$0]  %s1, 8192, %s29, [#allocation6], 256, 256, 16
    $region9: #{hypercube_forward.1} parent=1 // pred_fallthru
      _
    // Predicated region
    $region10: #{hypercube_forward.1} parent=1 // pred_check
      _
    $region11: #{hypercube_forward.1} parent=1 // pred_check_branch
      %36 = sbr.rel (0) target = $region13
    $region12: #{hypercube_forward.1} parent=1 // pred_region
      _
    $region13: #{hypercube_forward.1} parent=1 // pred_fallthru
      _
    // Predicated region
    $region14: #{hypercube_forward.1} parent=1 // pred_check
      _
    $region15: #{hypercube_forward.1} parent=1 // pred_check_branch
      %38 = sbr.rel (0) target = $region17
    $region16: #{hypercube_forward.1} parent=1 // pred_region
      %39 = dma.done [#allocation3], 512
    $region17: #{hypercube_forward.1} parent=1 // pred_fallthru
      _
    // Predicated region
    $region18: #{hypercube_forward.1} parent=1 // pred_check
      _
    $region19: #{hypercube_forward.1} parent=1 // pred_check_branch
      %41 = sbr.rel (0) target = $region21
    $region20: #{hypercube_forward.1} parent=1 // pred_region
      %42 = dma.done [#allocation6], 8192
    $region21: #{hypercube_forward.1} parent=1 // pred_fallthru
      _
    %v43 = vld [vmem:[#allocation2] sm:$0xff]
    %v44 = vld [vmem:[#allocation2 + $0x8] sm:$0xff]
    %v45 = vld [vmem:[#allocation2 + $0x10] sm:$0xff]
    %v46 = vld [vmem:[#allocation2 + $0x18] sm:$0xff]
    %v47 = vld [vmem:[#allocation5] sm:$0xff]
    %v48 = vld [vmem:[#allocation5 + $0x8] sm:$0xff]
    %v49 = vld [vmem:[#allocation5 + $0x10] sm:$0xff]
    %v50 = vld [vmem:[#allocation5 + $0x18] sm:$0xff]
    %v51 = vld [vmem:[#allocation5 + $0x20] sm:$0xff]
    %v52 = vld [vmem:[#allocation5 + $0x28] sm:$0xff]
    %v53 = vld [vmem:[#allocation5 + $0x30] sm:$0xff]
    %v54 = vld [vmem:[#allocation5 + $0x38] sm:$0xff]
    %v55 = vld [vmem:[#allocation5 + $0x40] sm:$0xff]
    %v56 = vld [vmem:[#allocation5 + $0x48] sm:$0xff]
    %v57 = vld [vmem:[#allocation5 + $0x50] sm:$0xff]
    %v58 = vld [vmem:[#allocation5 + $0x58] sm:$0xff]
    %v59 = vld [vmem:[#allocation5 + $0x60] sm:$0xff]
    %v60 = vld [vmem:[#allocation5 + $0x68] sm:$0xff]
    %v61 = vld [vmem:[#allocation5 + $0x70] sm:$0xff]
    %v62 = vld [vmem:[#allocation5 + $0x78] sm:$0xff]
    %v63 = vld [vmem:[#allocation5 + $0x80] sm:$0xff]
    %v64 = vld [vmem:[#allocation5 + $0x88] sm:$0xff]
    %v65 = vld [vmem:[#allocation5 + $0x90] sm:$0xff]
    %v66 = vld [vmem:[#allocation5 + $0x98] sm:$0xff]
    %v67 = vld [vmem:[#allocation5 + $0xa0] sm:$0xff]
    %v68 = vld [vmem:[#allocation5 + $0xa8] sm:$0xff]
    %v69 = vld [vmem:[#allocation5 + $0xb0] sm:$0xff]
    %v70 = vld [vmem:[#allocation5 + $0xb8] sm:$0xff]
    %v71 = vld [vmem:[#allocation5 + $0xc0] sm:$0xff]
    %v72 = vld [vmem:[#allocation5 + $0xc8] sm:$0xff]
    %v73 = vld [vmem:[#allocation5 + $0xd0] sm:$0xff]
    %v74 = vld [vmem:[#allocation5 + $0xd8] sm:$0xff]
    %v75 = vld [vmem:[#allocation5 + $0xe0] sm:$0xff]
    %v76 = vld [vmem:[#allocation5 + $0xe8] sm:$0xff]
    %v77 = vld [vmem:[#allocation5 + $0xf0] sm:$0xff]
    %v78 = vld [vmem:[#allocation5 + $0xf8] sm:$0xff]
    %v79 = vld [vmem:[#allocation5 + $0x100] sm:$0xff]
    %v80 = vld [vmem:[#allocation5 + $0x108] sm:$0xff]
    %v81 = vld [vmem:[#allocation5 + $0x110] sm:$0xff]
    %v82 = vld [vmem:[#allocation5 + $0x118] sm:$0xff]
    %v83 = vld [vmem:[#allocation5 + $0x120] sm:$0xff]
    %v84 = vld [vmem:[#allocation5 + $0x128] sm:$0xff]
    %v85 = vld [vmem:[#allocation5 + $0x130] sm:$0xff]
    %v86 = vld [vmem:[#allocation5 + $0x138] sm:$0xff]
    %v87 = vld [vmem:[#allocation5 + $0x140] sm:$0xff]
    %v88 = vld [vmem:[#allocation5 + $0x148] sm:$0xff]
    %v89 = vld [vmem:[#allocation5 + $0x150] sm:$0xff]
    %v90 = vld [vmem:[#allocation5 + $0x158] sm:$0xff]
    %v91 = vld [vmem:[#allocation5 + $0x160] sm:$0xff]
    %v92 = vld [vmem:[#allocation5 + $0x168] sm:$0xff]
    %v93 = vld [vmem:[#allocation5 + $0x170] sm:$0xff]
    %v94 = vld [vmem:[#allocation5 + $0x178] sm:$0xff]
    %v95 = vld [vmem:[#allocation5 + $0x180] sm:$0xff]
    %v96 = vld [vmem:[#allocation5 + $0x188] sm:$0xff]
    %v97 = vld [vmem:[#allocation5 + $0x190] sm:$0xff]
    %v98 = vld [vmem:[#allocation5 + $0x198] sm:$0xff]
    %v99 = vld [vmem:[#allocation5 + $0x1a0] sm:$0xff]
    %v100 = vld [vmem:[#allocation5 + $0x1a8] sm:$0xff]
    %v101 = vld [vmem:[#allocation5 + $0x1b0] sm:$0xff]
    %v102 = vld [vmem:[#allocation5 + $0x1b8] sm:$0xff]
    %v103 = vld [vmem:[#allocation5 + $0x1c0] sm:$0xff]
    %v104 = vld [vmem:[#allocation5 + $0x1c8] sm:$0xff]
    %v105 = vld [vmem:[#allocation5 + $0x1d0] sm:$0xff]
    %v106 = vld [vmem:[#allocation5 + $0x1d8] sm:$0xff]
    %v107 = vld [vmem:[#allocation5 + $0x1e0] sm:$0xff]
    %v108 = vld [vmem:[#allocation5 + $0x1e8] sm:$0xff]
    %v109 = vld [vmem:[#allocation5 + $0x1f0] sm:$0xff]
    %v110 = vld [vmem:[#allocation5 + $0x1f8] sm:$0xff]
    %v111 = vld [vmem:[%s2] sm:$0x3]
    %v113 = vlaneseq
    %v114 = vshrl.u32 %v113, 7
    %v115 = vsub.s32 0, %v114
    %v116 = vrot.slane %v111, %v115
    %v117 = vlaneseq
    %v118 = vshrl.u32 %v117, 7
    %v119 = vsub.s32 1, %v118
    %v120 = vrot.slane %v111, %v119
    %123 = vmatprep.subr.mxu0 %v78
    %124 = vmatpush1.msra.mxu0 %v77
    %125 = vmatprep.subr.mxu0 %v76
    %126 = vmatpush1.msra.mxu0 %v75
    %127 = vmatprep.subr.mxu0 %v74
    %128 = vmatpush1.msra.mxu0 %v73
    %129 = vmatprep.subr.mxu0 %v72
    %130 = vmatpush1.msra.mxu0 %v71
    %131 = vmatprep.subr.mxu0 %v70
    %132 = vmatpush1.msra.mxu0 %v69
    %133 = vmatprep.subr.mxu0 %v68
    %134 = vmatpush1.msra.mxu0 %v67
    %135 = vmatprep.subr.mxu0 %v66
    %136 = vmatpush1.msra.mxu0 %v65
    %137 = vmatprep.subr.mxu0 %v64
    %138 = vmatpush1.msra.mxu0 %v63
    %139 = vmatprep.subr.mxu0 %v62
    %140 = vmatpush1.msra.mxu0 %v61
    %141 = vmatprep.subr.mxu0 %v60
    %142 = vmatpush1.msra.mxu0 %v59
    %143 = vmatprep.subr.mxu0 %v58
    %144 = vmatpush1.msra.mxu0 %v57
    %145 = vmatprep.subr.mxu0 %v56
    %146 = vmatpush1.msra.mxu0 %v55
    %147 = vmatprep.subr.mxu0 %v54
    %148 = vmatpush1.msra.mxu0 %v53
    %149 = vmatprep.subr.mxu0 %v52
    %150 = vmatpush1.msra.mxu0 %v51
    %151 = vmatprep.subr.mxu0 %v50
    %152 = vmatpush1.msra.mxu0 %v49
    %153 = vmatprep.subr.mxu0 %v48
    %154 = vmatpush1.msra.mxu0 %v47
    %155 = vmatprep.subr.mxu0 %v110
    %156 = vmatpush2.msra.mxu0 %v109
    %157 = vmatprep.subr.mxu0 %v108
    %158 = vmatpush2.msra.mxu0 %v107
    %159 = vmatprep.subr.mxu0 %v106
    %160 = vmatpush2.msra.mxu0 %v105
    %161 = vmatprep.subr.mxu0 %v104
    %162 = vmatpush2.msra.mxu0 %v103
    %163 = vmatprep.subr.mxu0 %v102
    %164 = vmatpush2.msra.mxu0 %v101
    %165 = vmatprep.subr.mxu0 %v100
    %166 = vmatpush2.msra.mxu0 %v99
    %167 = vmatprep.subr.mxu0 %v98
    %168 = vmatpush2.msra.mxu0 %v97
    %169 = vmatprep.subr.mxu0 %v96
    %170 = vmatpush2.msra.mxu0 %v95
    %171 = vmatprep.subr.mxu0 %v94
    %172 = vmatpush2.msra.mxu0 %v93
    %173 = vmatprep.subr.mxu0 %v92
    %174 = vmatpush2.msra.mxu0 %v91
    %175 = vmatprep.subr.mxu0 %v90
    %176 = vmatpush2.msra.mxu0 %v89
    %177 = vmatprep.subr.mxu0 %v88
    %178 = vmatpush2.msra.mxu0 %v87
    %179 = vmatprep.subr.mxu0 %v86
    %180 = vmatpush2.msra.mxu0 %v85
    %181 = vmatprep.subr.mxu0 %v84
    %182 = vmatpush2.msra.mxu0 %v83
    %183 = vmatprep.subr.mxu0 %v82
    %184 = vmatpush2.msra.mxu0 %v81
    %185 = vmatprep.subr.mxu0 %v80
    %186 = vmatpush2.msra.mxu0 %v79
    %187 = vmatprep.mubr.f32.mxu0 %v44
    %188 = vmatmul.mubr.f32.gmra.mxu0 %v43
    %v189 = vpop.f32.mrf.mxu0
    %v190 = vadd.f32 %v116, %v189
    %v191 = vpop.f32.mrf.mxu0
    %v192 = vadd.f32 %v120, %v191
    %193 = vmatprep.mubr.f32.mxu0 %v46
    %194 = vmatmul.mubr.f32.gmra.mxu0 %v45
    %v195 = vpop.f32.mrf.mxu0
    %v196 = vadd.f32 %v116, %v195
    %v197 = vpop.f32.mrf.mxu0
    %v198 = vadd.f32 %v120, %v197
    %199 = vdwg.mxu0
    %200 = vst [vmem:[#allocation7] sm:$0xff] %v190
    %201 = vst [vmem:[#allocation7 + $0x8] sm:$0xff] %v192
    %202 = vst [vmem:[#allocation7 + $0x10] sm:$0xff] %v196
    %203 = vst [vmem:[#allocation7 + $0x18] sm:$0xff] %v198
    // Predicated region
    $region22: #{hypercube_forward.1} parent=1 // pred_check
      _
    $region23: #{hypercube_forward.1} parent=1 // pred_check_branch
      %205 = sbr.rel (0) target = $region25
    $region24: #{hypercube_forward.1} parent=1 // pred_region
      %s207 = ssub.s32 512, 512
      %208 = vsyncadd [#allocation4], %s207
      %s209 = sshll.u32 [#allocation7], 4
      %s210 = int_to_ptr.vmem [resolvable:$true] %s209
      %215 = dma.vmem_to_hbm [thread:$0]  %s210, 512, %s3, [#allocation4], 256, 256, 16
    $region25: #{hypercube_forward.1} parent=1 // pred_fallthru
      _
    // Predicated region
    $region26: #{hypercube_forward.1} parent=1 // pred_check
      _
    $region27: #{hypercube_forward.1} parent=1 // pred_check_branch
      %217 = sbr.rel (0) target = $region29
    $region28: #{hypercube_forward.1} parent=1 // pred_region
      %218 = dma.done [#allocation4], 512
    $region29: #{hypercube_forward.1} parent=1 // pred_fallthru
      _
    %219 = vsyncpa [#allocation3], 1
    %220 = vsyncpa [#allocation6], 1
    %221 = vsyncpa [#allocation4], 1

</llo_original>
